<compile_context>
chip_gen: v6e
topology: v6e:2x2x1
jax: 0.10.0
libtpu: 0.0.40
codegen_flags: <defaults>
</compile_context>

<pallas_src>
import numpy as np
import jax
import jax.numpy as jnp
from jax.experimental import pallas as pl
from jax.experimental.pallas import tpu as pltpu

BN_EPS = 1e-5


# ------------------------------ Pallas kernel ------------------------------ #
def _make_conv_kernel(num_phases, taps, cout, m, has_mask, has_residual,
                      apply_relu, store_offset):
    """3x3 conv as 9 accumulated tap matmuls + folded-BN bias + residual + ReLU."""

    def kernel(*refs):
        ph_refs = refs[:num_phases]            # each: (1, Cin, Lphase) bf16
        w_ref = refs[num_phases]               # (9, Cout, Cin) bf16 (BN scale folded)
        b_ref = refs[num_phases + 1]           # (Cout, 1) f32 (folded BN bias)
        pos = num_phases + 2
        m_ref = None
        r_ref = None
        if has_mask:
            m_ref = refs[pos]; pos += 1        # (1, M) f32 valid-column mask
        if has_residual:
            r_ref = refs[pos]; pos += 1        # (1, Cout, M) f32 shortcut
        o_ref = refs[pos]

        acc = jnp.zeros((cout, m), jnp.float32)
        # Implicit im2col: 9 shifted stride-1 slices of the VMEM-resident phases,
        # each feeding one MXU matmul with f32 accumulation.  Unrolled at trace time.
        for t, (p, off) in enumerate(taps):
            x_t = ph_refs[p][0, :, pl.ds(off, m)]                  # (Cin, M) bf16
            acc = acc + jnp.dot(w_ref[t], x_t,
                                preferred_element_type=jnp.float32)
        acc = acc + b_ref[...]                                     # folded BN bias
        if has_residual:
            acc = acc + r_ref[0].astype(jnp.float32)               # shortcut add
        if apply_relu:
            acc = jnp.maximum(acc, 0.0)
        if has_mask:
            acc = acc * m_ref[...]                                 # zero garbage cols

        if store_offset is None:
            o_ref[0] = acc.astype(o_ref.dtype)
        else:
            # Write directly in the NEXT conv's zero-padded input layout:
            # zero borders + interior shifted by one padded row and one column.
            o_ref[...] = jnp.zeros(o_ref.shape, o_ref.dtype)
            o_ref[0, :, pl.ds(store_offset, m)] = acc.astype(o_ref.dtype)

    return kernel


def conv3x3_bn_act(phases, w_taps, bias, *, taps, ho, wo, wrs,
                   residual=None, mask=None, apply_relu=True,
                   out_dtype=jnp.float32, padded_out=False):
    """Fused 3x3 conv (+BN bias, +residual, +ReLU), channels-first flattened layout."""
    n, cin, lphase = phases[0].shape
    cout = w_taps.shape[1]
    m = ho * wrs                                   # spatial (rows x padded width) on lanes
    lout = (ho + 3) * wrs if padded_out else m
    store_offset = (wrs + 1) if padded_out else None

    in_specs = [pl.BlockSpec((1, cin, lphase), lambda i: (i, 0, 0)) for _ in phases]
    in_specs.append(pl.BlockSpec((9, cout, cin), lambda i: (0, 0, 0)))     # weights (resident)
    in_specs.append(pl.BlockSpec((cout, 1), lambda i: (0, 0)))             # bias (resident)
    args = list(phases) + [w_taps, bias]
    if mask is not None:
        in_specs.append(pl.BlockSpec((1, m), lambda i: (0, 0)))
        args.append(mask)
    if residual is not None:
        in_specs.append(pl.BlockSpec((1, cout, m), lambda i: (i, 0, 0)))
        args.append(residual)

    kernel = _make_conv_kernel(len(phases), taps, cout, m, mask is not None,
                               residual is not None, apply_relu, store_offset)
    return pl.pallas_call(
        kernel,
        out_shape=jax.ShapeDtypeStruct((n, cout, lout), out_dtype),
        grid=(n,),                                  # one whole image per grid step
        in_specs=in_specs,
        out_specs=pl.BlockSpec((1, cout, lout), lambda i: (i, 0, 0)),
        compiler_params=pltpu.CompilerParams(dimension_semantics=("parallel",)),
    )(*args)


# ------------------------------- JAX glue ----------------------------------- #
def _fold_bn(w_oihw, gamma, beta, mean, var):
    scale = gamma / jnp.sqrt(var + BN_EPS)
    return w_oihw * scale[:, None, None, None], beta - mean * scale


def _weights_to_taps(w_oihw):
    cout, cin = w_oihw.shape[:2]
    # (Cout, Cin, 3, 3) -> (9, Cout, Cin) with tap index t = kh*3 + kw
    return jnp.transpose(w_oihw, (2, 3, 0, 1)).reshape(9, cout, cin)


def _phases_stride1(x, h, w):
    # Single phase: zero-padded image flattened with row stride w+2 (1 extra bottom row
    # so the largest shifted slice stays in bounds for the garbage tail columns).
    wrs = w + 2
    xp = jnp.pad(x, ((0, 0), (0, 0), (1, 2), (1, 1)))
    return [xp.reshape(x.shape[0], x.shape[1], (h + 3) * wrs)], wrs, h, w


def _phases_stride2(x, h, w):
    # Space-to-batch: 4 parity phases of the padded image -> every tap of the
    # stride-2 conv becomes a stride-1 shifted slice of one phase.
    assert h % 2 == 0 and w % 2 == 0
    ho, wo = h // 2, w // 2
    wrs = wo + 2
    xp = jnp.pad(x, ((0, 0), (0, 0), (1, 1), (1, 1)))
    phases = []
    for a in range(2):
        for b in range(2):
            p = xp[:, :, a::2, b::2]                               # (N, C, ho+1, wo+1)
            p = jnp.pad(p, ((0, 0), (0, 0), (0, 1), (0, 1)))       # (N, C, ho+2, wrs)
            phases.append(p.reshape(x.shape[0], x.shape[1], (ho + 2) * wrs))
    return phases, wrs, ho, wo


def _taps_stride1(wrs):
    return [(0, kh * wrs + kw) for kh in range(3) for kw in range(3)]


def _taps_stride2(wrs):
    return [((kh % 2) * 2 + (kw % 2), (kh // 2) * wrs + (kw // 2))
            for kh in range(3) for kw in range(3)]


def _shortcut(x, in_planes, planes, stride, ho, wo, wrs):
    # LambdaLayer "option A": spatial ::2 subsample + zero channel pad, or identity.
    if stride != 1 or in_planes != planes:
        diff = planes - in_planes
        sc = x[:, :, ::2, ::2]
        sc = jnp.pad(sc, ((0, 0), (int(diff * 0.5), int((diff + 1) * 0.5)), (0, 0), (0, 0)))
    else:
        sc = x
    sc = jnp.pad(sc, ((0, 0), (0, 0), (0, 0), (0, wrs - wo)))      # pad W to row stride
    return sc.reshape(x.shape[0], planes, ho * wrs).astype(jnp.float32)


def block_forward(x_nchw, params, in_planes, planes, stride):
    n, c, h, w = x_nchw.shape
    assert c == in_planes
    x_bf = x_nchw.astype(jnp.bfloat16)             # conv path in bf16, shortcut stays f32

    wf1, bias1 = _fold_bn(params["conv1_w"], params["bn1_g"], params["bn1_b"],
                          params["bn1_m"], params["bn1_v"])
    wf2, bias2 = _fold_bn(params["conv2_w"], params["bn2_g"], params["bn2_b"],
                          params["bn2_m"], params["bn2_v"])
    w1_taps = _weights_to_taps(wf1).astype(jnp.bfloat16)
    w2_taps = _weights_to_taps(wf2).astype(jnp.bfloat16)
    b1 = bias1.reshape(planes, 1).astype(jnp.float32)
    b2 = bias2.reshape(planes, 1).astype(jnp.float32)

    if stride == 1:
        phases, wrs, ho, wo = _phases_stride1(x_bf, h, w)
        taps1 = _taps_stride1(wrs)
    else:
        phases, wrs, ho, wo = _phases_stride2(x_bf, h, w)
        taps1 = _taps_stride2(wrs)

    m = ho * wrs
    mask = jnp.tile((jnp.arange(wrs) < wo).astype(jnp.float32), ho)[None, :]   # (1, M)

    # conv1 + bn1 + relu; output written directly as conv2's zero-padded input (bf16).
    out1 = conv3x3_bn_act(phases, w1_taps, b1, taps=taps1, ho=ho, wo=wo, wrs=wrs,
                          mask=mask, apply_relu=True, out_dtype=jnp.bfloat16,
                          padded_out=True)

    # shortcut in conv2's flattened output layout (f32).
    sc = _shortcut(x_nchw, in_planes, planes, stride, ho, wo, wrs)

    # conv2 + bn2 + shortcut add + relu.
    out2 = conv3x3_bn_act([out1], w2_taps, b2, taps=_taps_stride1(wrs),
                          ho=ho, wo=wo, wrs=wrs, residual=sc, apply_relu=True,
                          out_dtype=jnp.float32, padded_out=False)

    return out2.reshape(n, planes, ho, wrs)[:, :, :, :wo]          # strip garbage cols


# ----------------------------- pure-JAX reference ---------------------------- #
def _conv_ref(x, w, stride):
    return jax.lax.conv_general_dilated(
        x, w, (stride, stride), ((1, 1), (1, 1)),
        dimension_numbers=("NCHW", "OIHW", "NCHW"),
        preferred_element_type=jnp.float32)


def block_forward_ref(x_nchw, params, in_planes, planes, stride):
    x_bf = x_nchw.astype(jnp.bfloat16)
    wf1, b1 = _fold_bn(params["conv1_w"], params["bn1_g"], params["bn1_b"],
                       params["bn1_m"], params["bn1_v"])
    wf2, b2 = _fold_bn(params["conv2_w"], params["bn2_g"], params["bn2_b"],
                       params["bn2_m"], params["bn2_v"])
    out = _conv_ref(x_bf, wf1.astype(jnp.bfloat16), stride) + b1[None, :, None, None]
    out = jnp.maximum(out, 0.0).astype(jnp.bfloat16)   # mirror the bf16 intermediate
    out = _conv_ref(out, wf2.astype(jnp.bfloat16), 1) + b2[None, :, None, None]
    if stride != 1 or in_planes != planes:
        diff = planes - in_planes
        sc = x_nchw[:, :, ::2, ::2]
        sc = jnp.pad(sc, ((0, 0), (int(diff * 0.5), int((diff + 1) * 0.5)), (0, 0), (0, 0)))
    else:
        sc = x_nchw
    return jnp.maximum(out + sc, 0.0)


# ---------------------------------- main ------------------------------------ #
def make_params(key, in_planes, planes):
    ks = jax.random.split(key, 6)
    return {
        "conv1_w": jax.random.normal(ks[0], (planes, in_planes, 3, 3), jnp.float32) * 0.1,
        "conv2_w": jax.random.normal(ks[1], (planes, planes, 3, 3), jnp.float32) * 0.1,
        "bn1_g": 1.0 + 0.1 * jax.random.normal(ks[2], (planes,), jnp.float32),
        "bn1_b": 0.1 * jax.random.normal(ks[3], (planes,), jnp.float32),
        "bn1_m": 0.05 * jnp.arange(planes, dtype=jnp.float32),
        "bn1_v": 0.5 + 0.05 * jnp.arange(planes, dtype=jnp.float32),
        "bn2_g": 1.0 + 0.1 * jax.random.normal(ks[4], (planes,), jnp.float32),
        "bn2_b": 0.1 * jax.random.normal(ks[5], (planes,), jnp.float32),
        "bn2_m": -0.05 * jnp.arange(planes, dtype=jnp.float32),
        "bn2_v": 0.75 + 0.05 * jnp.arange(planes, dtype=jnp.float32),
    }


if __name__ == "__main__":
    key = jax.random.PRNGKey(0)
    k_x, k_p1, k_p2 = jax.random.split(key, 3)

    # Case 1: stride=2 + channel expansion -> exercises the zero-pad "option A" shortcut.
    in_planes, planes, stride = 4, 8, 2
    x = jax.random.normal(k_x, (2, in_planes, 16, 16), jnp.float32)   # NCHW, as in PyTorch
    params = make_params(k_p1, in_planes, planes)

    out = jax.block_until_ready(block_forward(x, params, in_planes, planes, stride))
    ref = block_forward_ref(x, params, in_planes, planes, stride)
    np.testing.assert_allclose(np.asarray(out), np.asarray(ref), rtol=5e-3, atol=5e-3)

    # Case 2: stride=1, identity shortcut (second block fed with case-1 output).
    params2 = make_params(k_p2, planes, planes)
    out2 = jax.block_until_ready(block_forward(out, params2, planes, planes, 1))
    ref2 = block_forward_ref(out, params2, planes, planes, 1)
    np.testing.assert_allclose(np.asarray(out2), np.asarray(ref2), rtol=5e-3, atol=5e-3)

    print("KERNEL_OK")
</pallas_src>

<mosaic_0001>
module attributes {stable_mosaic.version = 11 : i64} {
  func.func @kernel(%arg0: i32, %arg1: memref<1x4x100xbf16, #tpu.memory_space<vmem>>, %arg2: memref<1x4x100xbf16, #tpu.memory_space<vmem>>, %arg3: memref<1x4x100xbf16, #tpu.memory_space<vmem>>, %arg4: memref<1x4x100xbf16, #tpu.memory_space<vmem>>, %arg5: memref<9x8x4xbf16, #tpu.memory_space<vmem>>, %arg6: memref<8x1xf32, #tpu.memory_space<vmem>>, %arg7: memref<1x80xf32, #tpu.memory_space<vmem>>, %arg8: memref<1x8x110xbf16, #tpu.memory_space<vmem>>) attributes {dimension_semantics = [#tpu.dimension_semantics<parallel>], iteration_bounds = array<i64: 2>, scalar_prefetch = 0 : i64, scratch_operands = 0 : i64, tpu.core_type = #tpu.core_type<tc>, window_params = [{transform_indices = @transform_0, window_bounds = array<i64: 1, 4, 100>}, {transform_indices = @transform_1, window_bounds = array<i64: 1, 4, 100>}, {transform_indices = @transform_2, window_bounds = array<i64: 1, 4, 100>}, {transform_indices = @transform_3, window_bounds = array<i64: 1, 4, 100>}, {pipeline_mode = #tpu.pipeline_mode<synchronous>, transform_indices = @transform_4, window_bounds = array<i64: 9, 8, 4>}, {pipeline_mode = #tpu.pipeline_mode<synchronous>, transform_indices = @transform_5, window_bounds = array<i64: 8, 1>}, {pipeline_mode = #tpu.pipeline_mode<synchronous>, transform_indices = @transform_6, window_bounds = array<i64: 1, 80>}, {transform_indices = @transform_7, window_bounds = array<i64: 1, 8, 110>}]} {
    %cst = arith.constant 0.000000e+00 : f32
    %0 = vector.broadcast %cst : f32 to vector<8x80xf32>
    %c0 = arith.constant 0 : index
    %c0_0 = arith.constant 0 : index
    %c0_1 = arith.constant 0 : index
    %1 = vector.load %arg1[%c0, %c0_0, %c0_1] : memref<1x4x100xbf16, #tpu.memory_space<vmem>>, vector<1x4x80xbf16>
    %2 = vector.shape_cast %1 : vector<1x4x80xbf16> to vector<4x80xbf16>
    %c0_2 = arith.constant 0 : index
    %c0_3 = arith.constant 0 : index
    %c0_4 = arith.constant 0 : index
    %3 = vector.load %arg5[%c0_2, %c0_3, %c0_4] : memref<9x8x4xbf16, #tpu.memory_space<vmem>>, vector<1x8x4xbf16>
    %4 = vector.shape_cast %3 : vector<1x8x4xbf16> to vector<8x4xbf16>
    %cst_5 = arith.constant dense<0.000000e+00> : vector<8x80xf32>
    %5 = tpu.matmul %4, %2, %cst_5 {dimension_numbers = #tpu.dot_dimension_numbers<[1], [0], [0], [1], [0, 0, 1, 1], [], []>} : vector<8x4xbf16>, vector<4x80xbf16>, vector<8x80xf32> -> vector<8x80xf32>
    %6 = arith.addf %0, %5 : vector<8x80xf32>
    %c0_6 = arith.constant 0 : index
    %c0_7 = arith.constant 0 : index
    %c0_8 = arith.constant 0 : index
    %7 = vector.load %arg2[%c0_6, %c0_7, %c0_8] : memref<1x4x100xbf16, #tpu.memory_space<vmem>>, vector<1x4x80xbf16>
    %8 = vector.shape_cast %7 : vector<1x4x80xbf16> to vector<4x80xbf16>
    %c1 = arith.constant 1 : index
    %c0_9 = arith.constant 0 : index
    %c0_10 = arith.constant 0 : index
    %9 = vector.load %arg5[%c1, %c0_9, %c0_10] : memref<9x8x4xbf16, #tpu.memory_space<vmem>>, vector<1x8x4xbf16>
    %10 = vector.shape_cast %9 : vector<1x8x4xbf16> to vector<8x4xbf16>
    %cst_11 = arith.constant dense<0.000000e+00> : vector<8x80xf32>
    %11 = tpu.matmul %10, %8, %cst_11 {dimension_numbers = #tpu.dot_dimension_numbers<[1], [0], [0], [1], [0, 0, 1, 1], [], []>} : vector<8x4xbf16>, vector<4x80xbf16>, vector<8x80xf32> -> vector<8x80xf32>
    %12 = arith.addf %6, %11 : vector<8x80xf32>
    %c0_12 = arith.constant 0 : index
    %c0_13 = arith.constant 0 : index
    %c1_14 = arith.constant 1 : index
    %13 = vector.load %arg1[%c0_12, %c0_13, %c1_14] : memref<1x4x100xbf16, #tpu.memory_space<vmem>>, vector<1x4x80xbf16>
    %14 = vector.shape_cast %13 : vector<1x4x80xbf16> to vector<4x80xbf16>
    %c2 = arith.constant 2 : index
    %c0_15 = arith.constant 0 : index
    %c0_16 = arith.constant 0 : index
    %15 = vector.load %arg5[%c2, %c0_15, %c0_16] : memref<9x8x4xbf16, #tpu.memory_space<vmem>>, vector<1x8x4xbf16>
    %16 = vector.shape_cast %15 : vector<1x8x4xbf16> to vector<8x4xbf16>
    %cst_17 = arith.constant dense<0.000000e+00> : vector<8x80xf32>
    %17 = tpu.matmul %16, %14, %cst_17 {dimension_numbers = #tpu.dot_dimension_numbers<[1], [0], [0], [1], [0, 0, 1, 1], [], []>} : vector<8x4xbf16>, vector<4x80xbf16>, vector<8x80xf32> -> vector<8x80xf32>
    %18 = arith.addf %12, %17 : vector<8x80xf32>
    %c0_18 = arith.constant 0 : index
    %c0_19 = arith.constant 0 : index
    %c0_20 = arith.constant 0 : index
    %19 = vector.load %arg3[%c0_18, %c0_19, %c0_20] : memref<1x4x100xbf16, #tpu.memory_space<vmem>>, vector<1x4x80xbf16>
    %20 = vector.shape_cast %19 : vector<1x4x80xbf16> to vector<4x80xbf16>
    %c3 = arith.constant 3 : index
    %c0_21 = arith.constant 0 : index
    %c0_22 = arith.constant 0 : index
    %21 = vector.load %arg5[%c3, %c0_21, %c0_22] : memref<9x8x4xbf16, #tpu.memory_space<vmem>>, vector<1x8x4xbf16>
    %22 = vector.shape_cast %21 : vector<1x8x4xbf16> to vector<8x4xbf16>
    %cst_23 = arith.constant dense<0.000000e+00> : vector<8x80xf32>
    %23 = tpu.matmul %22, %20, %cst_23 {dimension_numbers = #tpu.dot_dimension_numbers<[1], [0], [0], [1], [0, 0, 1, 1], [], []>} : vector<8x4xbf16>, vector<4x80xbf16>, vector<8x80xf32> -> vector<8x80xf32>
    %24 = arith.addf %18, %23 : vector<8x80xf32>
    %c0_24 = arith.constant 0 : index
    %c0_25 = arith.constant 0 : index
    %c0_26 = arith.constant 0 : index
    %25 = vector.load %arg4[%c0_24, %c0_25, %c0_26] : memref<1x4x100xbf16, #tpu.memory_space<vmem>>, vector<1x4x80xbf16>
    %26 = vector.shape_cast %25 : vector<1x4x80xbf16> to vector<4x80xbf16>
    %c4 = arith.constant 4 : index
    %c0_27 = arith.constant 0 : index
    %c0_28 = arith.constant 0 : index
    %27 = vector.load %arg5[%c4, %c0_27, %c0_28] : memref<9x8x4xbf16, #tpu.memory_space<vmem>>, vector<1x8x4xbf16>
    %28 = vector.shape_cast %27 : vector<1x8x4xbf16> to vector<8x4xbf16>
    %cst_29 = arith.constant dense<0.000000e+00> : vector<8x80xf32>
    %29 = tpu.matmul %28, %26, %cst_29 {dimension_numbers = #tpu.dot_dimension_numbers<[1], [0], [0], [1], [0, 0, 1, 1], [], []>} : vector<8x4xbf16>, vector<4x80xbf16>, vector<8x80xf32> -> vector<8x80xf32>
    %30 = arith.addf %24, %29 : vector<8x80xf32>
    %c0_30 = arith.constant 0 : index
    %c0_31 = arith.constant 0 : index
    %c1_32 = arith.constant 1 : index
    %31 = vector.load %arg3[%c0_30, %c0_31, %c1_32] : memref<1x4x100xbf16, #tpu.memory_space<vmem>>, vector<1x4x80xbf16>
    %32 = vector.shape_cast %31 : vector<1x4x80xbf16> to vector<4x80xbf16>
    %c5 = arith.constant 5 : index
    %c0_33 = arith.constant 0 : index
    %c0_34 = arith.constant 0 : index
    %33 = vector.load %arg5[%c5, %c0_33, %c0_34] : memref<9x8x4xbf16, #tpu.memory_space<vmem>>, vector<1x8x4xbf16>
    %34 = vector.shape_cast %33 : vector<1x8x4xbf16> to vector<8x4xbf16>
    %cst_35 = arith.constant dense<0.000000e+00> : vector<8x80xf32>
    %35 = tpu.matmul %34, %32, %cst_35 {dimension_numbers = #tpu.dot_dimension_numbers<[1], [0], [0], [1], [0, 0, 1, 1], [], []>} : vector<8x4xbf16>, vector<4x80xbf16>, vector<8x80xf32> -> vector<8x80xf32>
    %36 = arith.addf %30, %35 : vector<8x80xf32>
    %c0_36 = arith.constant 0 : index
    %c0_37 = arith.constant 0 : index
    %c10 = arith.constant 10 : index
    %37 = vector.load %arg1[%c0_36, %c0_37, %c10] : memref<1x4x100xbf16, #tpu.memory_space<vmem>>, vector<1x4x80xbf16>
    %38 = vector.shape_cast %37 : vector<1x4x80xbf16> to vector<4x80xbf16>
    %c6 = arith.constant 6 : index
    %c0_38 = arith.constant 0 : index
    %c0_39 = arith.constant 0 : index
    %39 = vector.load %arg5[%c6, %c0_38, %c0_39] : memref<9x8x4xbf16, #tpu.memory_space<vmem>>, vector<1x8x4xbf16>
    %40 = vector.shape_cast %39 : vector<1x8x4xbf16> to vector<8x4xbf16>
    %cst_40 = arith.constant dense<0.000000e+00> : vector<8x80xf32>
    %41 = tpu.matmul %40, %38, %cst_40 {dimension_numbers = #tpu.dot_dimension_numbers<[1], [0], [0], [1], [0, 0, 1, 1], [], []>} : vector<8x4xbf16>, vector<4x80xbf16>, vector<8x80xf32> -> vector<8x80xf32>
    %42 = arith.addf %36, %41 : vector<8x80xf32>
    %c0_41 = arith.constant 0 : index
    %c0_42 = arith.constant 0 : index
    %c10_43 = arith.constant 10 : index
    %43 = vector.load %arg2[%c0_41, %c0_42, %c10_43] : memref<1x4x100xbf16, #tpu.memory_space<vmem>>, vector<1x4x80xbf16>
    %44 = vector.shape_cast %43 : vector<1x4x80xbf16> to vector<4x80xbf16>
    %c7 = arith.constant 7 : index
    %c0_44 = arith.constant 0 : index
    %c0_45 = arith.constant 0 : index
    %45 = vector.load %arg5[%c7, %c0_44, %c0_45] : memref<9x8x4xbf16, #tpu.memory_space<vmem>>, vector<1x8x4xbf16>
    %46 = vector.shape_cast %45 : vector<1x8x4xbf16> to vector<8x4xbf16>
    %cst_46 = arith.constant dense<0.000000e+00> : vector<8x80xf32>
    %47 = tpu.matmul %46, %44, %cst_46 {dimension_numbers = #tpu.dot_dimension_numbers<[1], [0], [0], [1], [0, 0, 1, 1], [], []>} : vector<8x4xbf16>, vector<4x80xbf16>, vector<8x80xf32> -> vector<8x80xf32>
    %48 = arith.addf %42, %47 : vector<8x80xf32>
    %c0_47 = arith.constant 0 : index
    %c0_48 = arith.constant 0 : index
    %c11 = arith.constant 11 : index
    %49 = vector.load %arg1[%c0_47, %c0_48, %c11] : memref<1x4x100xbf16, #tpu.memory_space<vmem>>, vector<1x4x80xbf16>
    %50 = vector.shape_cast %49 : vector<1x4x80xbf16> to vector<4x80xbf16>
    %c8 = arith.constant 8 : index
    %c0_49 = arith.constant 0 : index
    %c0_50 = arith.constant 0 : index
    %51 = vector.load %arg5[%c8, %c0_49, %c0_50] : memref<9x8x4xbf16, #tpu.memory_space<vmem>>, vector<1x8x4xbf16>
    %52 = vector.shape_cast %51 : vector<1x8x4xbf16> to vector<8x4xbf16>
    %cst_51 = arith.constant dense<0.000000e+00> : vector<8x80xf32>
    %53 = tpu.matmul %52, %50, %cst_51 {dimension_numbers = #tpu.dot_dimension_numbers<[1], [0], [0], [1], [0, 0, 1, 1], [], []>} : vector<8x4xbf16>, vector<4x80xbf16>, vector<8x80xf32> -> vector<8x80xf32>
    %54 = arith.addf %48, %53 : vector<8x80xf32>
    %c0_52 = arith.constant 0 : index
    %c0_53 = arith.constant 0 : index
    %55 = vector.load %arg6[%c0_52, %c0_53] : memref<8x1xf32, #tpu.memory_space<vmem>>, vector<8x1xf32>
    %56 = vector.broadcast %55 : vector<8x1xf32> to vector<8x80xf32>
    %57 = arith.addf %54, %56 : vector<8x80xf32>
    %cst_54 = arith.constant 0.000000e+00 : f32
    %58 = vector.broadcast %cst_54 : f32 to vector<8x80xf32>
    %59 = arith.maximumf %57, %58 : vector<8x80xf32>
    %c0_55 = arith.constant 0 : index
    %c0_56 = arith.constant 0 : index
    %60 = vector.load %arg7[%c0_55, %c0_56] : memref<1x80xf32, #tpu.memory_space<vmem>>, vector<1x80xf32>
    %61 = vector.broadcast %60 : vector<1x80xf32> to vector<8x80xf32>
    %62 = arith.mulf %59, %61 : vector<8x80xf32>
    %cst_57 = arith.constant 0.000000e+00 : bf16
    %63 = vector.broadcast %cst_57 : bf16 to vector<1x8x110xbf16>
    %c0_58 = arith.constant 0 : index
    %c0_59 = arith.constant 0 : index
    %c0_60 = arith.constant 0 : index
    %64 = vector.load %arg8[%c0_58, %c0_59, %c0_60] : memref<1x8x110xbf16, #tpu.memory_space<vmem>>, vector<1x8x110xbf16>
    tpu.vector_store %arg8[%c0_58, %c0_59, %c0_60], %63 {strides = array<i32>} : memref<1x8x110xbf16, #tpu.memory_space<vmem>>, vector<1x8x110xbf16>,
    %65 = arith.truncf %62 : vector<8x80xf32> to vector<8x80xbf16>
    %c0_61 = arith.constant 0 : index
    %c0_62 = arith.constant 0 : index
    %c11_63 = arith.constant 11 : index
    %66 = vector.load %arg8[%c0_61, %c0_62, %c11_63] : memref<1x8x110xbf16, #tpu.memory_space<vmem>>, vector<1x8x80xbf16>
    %67 = vector.shape_cast %66 : vector<1x8x80xbf16> to vector<8x80xbf16>
    %68 = vector.shape_cast %65 : vector<8x80xbf16> to vector<1x8x80xbf16>
    tpu.vector_store %arg8[%c0_61, %c0_62, %c11_63], %68 {strides = array<i32>} : memref<1x8x110xbf16, #tpu.memory_space<vmem>>, vector<1x8x80xbf16>,
    return
  }
  func.func @transform_0(%arg0: i32) -> (i32, i32, i32) {
    %c0_i32 = arith.constant 0 : i32
    %c0_i32_0 = arith.constant 0 : i32
    %c0_i32_1 = arith.constant 0 : i32
    return %arg0, %c0_i32, %c0_i32_0 : i32, i32, i32
  }
  func.func @transform_1(%arg0: i32) -> (i32, i32, i32) {
    %c0_i32 = arith.constant 0 : i32
    %c0_i32_0 = arith.constant 0 : i32
    %c0_i32_1 = arith.constant 0 : i32
    return %arg0, %c0_i32, %c0_i32_0 : i32, i32, i32
  }
  func.func @transform_2(%arg0: i32) -> (i32, i32, i32) {
    %c0_i32 = arith.constant 0 : i32
    %c0_i32_0 = arith.constant 0 : i32
    %c0_i32_1 = arith.constant 0 : i32
    return %arg0, %c0_i32, %c0_i32_0 : i32, i32, i32
  }
  func.func @transform_3(%arg0: i32) -> (i32, i32, i32) {
    %c0_i32 = arith.constant 0 : i32
    %c0_i32_0 = arith.constant 0 : i32
    %c0_i32_1 = arith.constant 0 : i32
    return %arg0, %c0_i32, %c0_i32_0 : i32, i32, i32
  }
  func.func @transform_4(%arg0: i32) -> (i32, i32, i32) {
    %c0_i32 = arith.constant 0 : i32
    %c0_i32_0 = arith.constant 0 : i32
    %c0_i32_1 = arith.constant 0 : i32
    %c0_i32_2 = arith.constant 0 : i32
    return %c0_i32, %c0_i32_0, %c0_i32_1 : i32, i32, i32
  }
  func.func @transform_5(%arg0: i32) -> (i32, i32) {
    %c0_i32 = arith.constant 0 : i32
    %c0_i32_0 = arith.constant 0 : i32
    %c0_i32_1 = arith.constant 0 : i32
    return %c0_i32, %c0_i32_0 : i32, i32
  }
  func.func @transform_6(%arg0: i32) -> (i32, i32) {
    %c0_i32 = arith.constant 0 : i32
    %c0_i32_0 = arith.constant 0 : i32
    %c0_i32_1 = arith.constant 0 : i32
    return %c0_i32, %c0_i32_0 : i32, i32
  }
  func.func @transform_7(%arg0: i32) -> (i32, i32, i32) {
    %c0_i32 = arith.constant 0 : i32
    %c0_i32_0 = arith.constant 0 : i32
    %c0_i32_1 = arith.constant 0 : i32
    return %arg0, %c0_i32, %c0_i32_0 : i32, i32, i32
  }
}

</mosaic_0001>

<llo_original>
// kernel: tpu_custom_call.1
$region0: #{tpu_custom_call.1}
  #allocation0 [shape = 'u32[]', space=smem, size = 0x4, offset = 0x4, fixed_abs, tag = 'smem constant byte address 0x4 - core index']
  #allocation1 [shape = 'u32[144,128]{1,0:T(1,128)}', space=vmem, size = 0x12000, scoped, tag = 'internal scratch']
  %s0 = inlined_call_operand.vmem [shape: bf16[2,4,100], index: 0, kind: input, shape index: {}]
  %s1 = inlined_call_operand.vmem [shape: bf16[2,4,100], index: 1, kind: input, shape index: {}]
  %s2 = inlined_call_operand.vmem [shape: bf16[2,4,100], index: 2, kind: input, shape index: {}]
  %s3 = inlined_call_operand.vmem [shape: bf16[2,4,100], index: 3, kind: input, shape index: {}]
  %s4 = inlined_call_operand.vmem [shape: bf16[9,8,4], index: 4, kind: input, shape index: {}]
  %s5 = inlined_call_operand.vmem [shape: f32[8,1], index: 5, kind: input, shape index: {}]
  %s6 = inlined_call_operand.vmem [shape: f32[1,80], index: 6, kind: input, shape index: {}]
  %s7 = inlined_call_operand.hbm [shape: bf16[2,8,110], index: 7, kind: output, shape index: {}]
  %s8 = sld [smem:[#allocation0]]
  $region61: #{tpu_custom_call.1} parent=0
    _
  %s10 = ssub.s32 1, %s8
  %s11 = scalar_select 0, %s10, %s8
  $region1: #{tpu_custom_call.1} parent=0
    #allocation2 [shape = 'u8[4096]{0}', space=vmem, size = 0x1000, scoped, tag = 'output window, operand 0']
    #allocation3 [shape = 's32[2]{0}', space=sflag, size = 0x8, scoped, tag = 'scoped memory for tpu_custom_call.1']
    %12 = vsyncpa [#allocation3], 0
    %s13 = scalar_lea.sflag [#allocation3], 1
    %14 = vsyncpa %s13, 0
    loop: start=0, step=1, limit=4
    $region2: #{tpu_custom_call.1} parent=1 // loop_pre_header
      _
    $region3: #{tpu_custom_call.1} parent=1 // loop_header
      %s16 = sphi 0, %s20
      %p17 = scmp.ge.s32.totalorder %s16, 4
      %s26 = sphi 0, %s28
      %s29 = sphi 0, %s26
      %s30 = sphi 0, %s29
      %s46 = sphi 0, %s30
      %s52 = sphi 0, %s54
      %s55 = sphi 0, %s52
      %s56 = sphi 0, %s55
      %s72 = sphi 0, %s56
      %s78 = sphi 0, %s80
      %s81 = sphi 0, %s78
      %s82 = sphi 0, %s81
      %s98 = sphi 0, %s82
      %s104 = sphi 0, %s106
      %s107 = sphi 0, %s104
      %s108 = sphi 0, %s107
      %s124 = sphi 0, %s108
      %s128 = sphi 0, %s128
      %s130 = sphi 0, %s128
      %s131 = sphi 0, %s130
      %s145 = sphi 0, %s131
      %s149 = sphi 0, %s149
      %s151 = sphi 0, %s149
      %s152 = sphi 0, %s151
      %s166 = sphi 0, %s152
      %s170 = sphi 0, %s170
      %s172 = sphi 0, %s170
      %s173 = sphi 0, %s172
      %s187 = sphi 0, %s173
      %s193 = sphi 0, %s195
      %s196 = sphi 0, %s193
      %s197 = sphi 0, %s196
      %s213 = sphi 0, %s197
    $region4: #{tpu_custom_call.1} parent=1 // loop_header_branch
      %19 = sbr.rel (%p17) target = $region8
    $region5: #{tpu_custom_call.1} parent=1 // loop_body
      %s21 = ssub.s32 %s16, 1
      %s22 = ssub.s32 %s16, 2
      %s23 = sadd.s32 %s16, 1
      %s24 = ssub.s32 %s16, %s23
      %p25 = scmp.eq.s32.totalorder %s24, 0
      %s27 = sadd.s32 %s26, 1
      %s28 = scalar_select %p25, %s26, %s27
      %p31 = pneg %p25
      %p32 = scmp.eq.s32.totalorder %s16, 1
      %p33 = por %p31, %p32
      %p34 = scmp.ne.s32.totalorder %s26, %s29
      %p35 = scmp.eq.s32.totalorder %s16, 0
      %p36 = por %p34, %p35
      %p37 = scmp.ne.s32.totalorder %s26, %s29
      %p38 = scmp.eq.s32.totalorder %s21, 1
      %p39 = por %p37, %p38
      %p40 = scmp.ne.s32.totalorder %s29, %s30
      %p41 = scmp.eq.s32.totalorder %s21, 0
      %p42 = por %p40, %p41
      %p43 = scmp.ne.s32.totalorder %s29, %s30
      %p44 = scmp.eq.s32.totalorder %s22, 1
      %p45 = por %p43, %p44
      %p47 = scmp.ne.s32.totalorder %s30, %s46
      %p48 = scmp.eq.s32.totalorder %s22, 0
      %p49 = por %p47, %p48
      %s50 = ssub.s32 %s16, %s23
      %p51 = scmp.eq.s32.totalorder %s50, 0
      %s53 = sadd.s32 %s52, 1
      %s54 = scalar_select %p51, %s52, %s53
      %p57 = pneg %p51
      %p58 = scmp.eq.s32.totalorder %s16, 1
      %p59 = por %p57, %p58
      %p60 = scmp.ne.s32.totalorder %s52, %s55
      %p61 = scmp.eq.s32.totalorder %s16, 0
      %p62 = por %p60, %p61
      %p63 = scmp.ne.s32.totalorder %s52, %s55
      %p64 = scmp.eq.s32.totalorder %s21, 1
      %p65 = por %p63, %p64
      %p66 = scmp.ne.s32.totalorder %s55, %s56
      %p67 = scmp.eq.s32.totalorder %s21, 0
      %p68 = por %p66, %p67
      %p69 = scmp.ne.s32.totalorder %s55, %s56
      %p70 = scmp.eq.s32.totalorder %s22, 1
      %p71 = por %p69, %p70
      %p73 = scmp.ne.s32.totalorder %s56, %s72
      %p74 = scmp.eq.s32.totalorder %s22, 0
      %p75 = por %p73, %p74
      %s76 = ssub.s32 %s16, %s23
      %p77 = scmp.eq.s32.totalorder %s76, 0
      %s79 = sadd.s32 %s78, 1
      %s80 = scalar_select %p77, %s78, %s79
      %p83 = pneg %p77
      %p84 = scmp.eq.s32.totalorder %s16, 1
      %p85 = por %p83, %p84
      %p86 = scmp.ne.s32.totalorder %s78, %s81
      %p87 = scmp.eq.s32.totalorder %s16, 0
      %p88 = por %p86, %p87
      %p89 = scmp.ne.s32.totalorder %s78, %s81
      %p90 = scmp.eq.s32.totalorder %s21, 1
      %p91 = por %p89, %p90
      %p92 = scmp.ne.s32.totalorder %s81, %s82
      %p93 = scmp.eq.s32.totalorder %s21, 0
      %p94 = por %p92, %p93
      %p95 = scmp.ne.s32.totalorder %s81, %s82
      %p96 = scmp.eq.s32.totalorder %s22, 1
      %p97 = por %p95, %p96
      %p99 = scmp.ne.s32.totalorder %s82, %s98
      %p100 = scmp.eq.s32.totalorder %s22, 0
      %p101 = por %p99, %p100
      %s102 = ssub.s32 %s16, %s23
      %p103 = scmp.eq.s32.totalorder %s102, 0
      %s105 = sadd.s32 %s104, 1
      %s106 = scalar_select %p103, %s104, %s105
      %p109 = pneg %p103
      %p110 = scmp.eq.s32.totalorder %s16, 1
      %p111 = por %p109, %p110
      %p112 = scmp.ne.s32.totalorder %s104, %s107
      %p113 = scmp.eq.s32.totalorder %s16, 0
      %p114 = por %p112, %p113
      %p115 = scmp.ne.s32.totalorder %s104, %s107
      %p116 = scmp.eq.s32.totalorder %s21, 1
      %p117 = por %p115, %p116
      %p118 = scmp.ne.s32.totalorder %s107, %s108
      %p119 = scmp.eq.s32.totalorder %s21, 0
      %p120 = por %p118, %p119
      %p121 = scmp.ne.s32.totalorder %s107, %s108
      %p122 = scmp.eq.s32.totalorder %s22, 1
      %p123 = por %p121, %p122
      %p125 = scmp.ne.s32.totalorder %s108, %s124
      %p126 = scmp.eq.s32.totalorder %s22, 0
      %p127 = por %p125, %p126
      %s129 = sadd.s32 %s128, 1
      %p132 = scmp.eq.s32.totalorder %s16, 1
      %p133 = scmp.ne.s32.totalorder %s128, %s130
      %p134 = scmp.eq.s32.totalorder %s16, 0
      %p135 = por %p133, %p134
      %p136 = scmp.ne.s32.totalorder %s128, %s130
      %p137 = scmp.eq.s32.totalorder %s21, 1
      %p138 = por %p136, %p137
      %p139 = scmp.ne.s32.totalorder %s130, %s131
      %p140 = scmp.eq.s32.totalorder %s21, 0
      %p141 = por %p139, %p140
      %p142 = scmp.ne.s32.totalorder %s130, %s131
      %p143 = scmp.eq.s32.totalorder %s22, 1
      %p144 = por %p142, %p143
      %p146 = scmp.ne.s32.totalorder %s131, %s145
      %p147 = scmp.eq.s32.totalorder %s22, 0
      %p148 = por %p146, %p147
      %s150 = sadd.s32 %s149, 1
      %p153 = scmp.eq.s32.totalorder %s16, 1
      %p154 = scmp.ne.s32.totalorder %s149, %s151
      %p155 = scmp.eq.s32.totalorder %s16, 0
      %p156 = por %p154, %p155
      %p157 = scmp.ne.s32.totalorder %s149, %s151
      %p158 = scmp.eq.s32.totalorder %s21, 1
      %p159 = por %p157, %p158
      %p160 = scmp.ne.s32.totalorder %s151, %s152
      %p161 = scmp.eq.s32.totalorder %s21, 0
      %p162 = por %p160, %p161
      %p163 = scmp.ne.s32.totalorder %s151, %s152
      %p164 = scmp.eq.s32.totalorder %s22, 1
      %p165 = por %p163, %p164
      %p167 = scmp.ne.s32.totalorder %s152, %s166
      %p168 = scmp.eq.s32.totalorder %s22, 0
      %p169 = por %p167, %p168
      %s171 = sadd.s32 %s170, 1
      %p174 = scmp.eq.s32.totalorder %s16, 1
      %p175 = scmp.ne.s32.totalorder %s170, %s172
      %p176 = scmp.eq.s32.totalorder %s16, 0
      %p177 = por %p175, %p176
      %p178 = scmp.ne.s32.totalorder %s170, %s172
      %p179 = scmp.eq.s32.totalorder %s21, 1
      %p180 = por %p178, %p179
      %p181 = scmp.ne.s32.totalorder %s172, %s173
      %p182 = scmp.eq.s32.totalorder %s21, 0
      %p183 = por %p181, %p182
      %p184 = scmp.ne.s32.totalorder %s172, %s173
      %p185 = scmp.eq.s32.totalorder %s22, 1
      %p186 = por %p184, %p185
      %p188 = scmp.ne.s32.totalorder %s173, %s187
      %p189 = scmp.eq.s32.totalorder %s22, 0
      %p190 = por %p188, %p189
      %s191 = ssub.s32 %s16, %s23
      %p192 = scmp.eq.s32.totalorder %s191, 0
      %s194 = sadd.s32 %s193, 1
      %s195 = scalar_select %p192, %s193, %s194
      %p198 = pneg %p192
      %p199 = scmp.eq.s32.totalorder %s16, 1
      %p200 = por %p198, %p199
      %p201 = scmp.ne.s32.totalorder %s193, %s196
      %p202 = scmp.eq.s32.totalorder %s16, 0
      %p203 = por %p201, %p202
      %p204 = scmp.ne.s32.totalorder %s193, %s196
      %p205 = scmp.eq.s32.totalorder %s21, 1
      %p206 = por %p204, %p205
      %p207 = scmp.ne.s32.totalorder %s196, %s197
      %p208 = scmp.eq.s32.totalorder %s21, 0
      %p209 = por %p207, %p208
      %p210 = scmp.ne.s32.totalorder %s196, %s197
      %p211 = scmp.eq.s32.totalorder %s22, 1
      %p212 = por %p210, %p211
      %p214 = scmp.ne.s32.totalorder %s197, %s213
      %p215 = scmp.eq.s32.totalorder %s22, 0
      %p216 = por %p214, %p215
      %p217 = scmp.le.s32.totalorder 1, %s16
      %p218 = scmp.lt.s32.totalorder %s16, 3
      %p219 = pnand %p217, %p218
      %p220 = pneg %p219
      // Predicated region
      $region9: #{tpu_custom_call.1} parent=5 // pred_check
        _
      $region10: #{tpu_custom_call.1} parent=5 // pred_check_branch
        %222 = sbr.rel (%p219) target = $region12
      $region11: #{tpu_custom_call.1} parent=5 // pred_region
        %s223 = ssub.s32 %s16, 1
        // Predicated region
        $region13: #{tpu_custom_call.1} parent=11 // pred_check
          %p224 = pneg %p141
        $region14: #{tpu_custom_call.1} parent=11 // pred_check_branch
          %226 = sbr.rel (%p224) target = $region16
        $region15: #{tpu_custom_call.1} parent=11 // pred_region
          _
        $region16: #{tpu_custom_call.1} parent=11 // pred_fallthru
          _
        // Predicated region
        $region17: #{tpu_custom_call.1} parent=11 // pred_check
          %p227 = pneg %p162
        $region18: #{tpu_custom_call.1} parent=11 // pred_check_branch
          %229 = sbr.rel (%p227) target = $region20
        $region19: #{tpu_custom_call.1} parent=11 // pred_region
          _
        $region20: #{tpu_custom_call.1} parent=11 // pred_fallthru
          _
        // Predicated region
        $region21: #{tpu_custom_call.1} parent=11 // pred_check
          %p230 = pneg %p183
        $region22: #{tpu_custom_call.1} parent=11 // pred_check_branch
          %232 = sbr.rel (%p230) target = $region24
        $region23: #{tpu_custom_call.1} parent=11 // pred_region
          _
        $region24: #{tpu_custom_call.1} parent=11 // pred_fallthru
          _
      $region12: #{tpu_custom_call.1} parent=5 // pred_fallthru
        _
      %p233 = scmp.lt.s32.totalorder %s16, 2
      // Predicated region
      $region25: #{tpu_custom_call.1} parent=5 // pred_check
        %p234 = pneg %p233
      $region26: #{tpu_custom_call.1} parent=5 // pred_check_branch
        %236 = sbr.rel (%p234) target = $region28
      $region27: #{tpu_custom_call.1} parent=5 // pred_region
        // Predicated region
        $region29: #{tpu_custom_call.1} parent=27 // pred_check
          %p237 = pneg %p36
        $region30: #{tpu_custom_call.1} parent=27 // pred_check_branch
          %239 = sbr.rel (%p237) target = $region32
        $region31: #{tpu_custom_call.1} parent=27 // pred_region
          %p240 = scmp.lt.s32.totalorder %s16, 1
          %s241 = scalar_select %p240, %s16, 1
          %s242 = smul.addr %s241, 2
          %s243 = scalar_lea.vmem %s0, %s242
        $region32: #{tpu_custom_call.1} parent=27 // pred_fallthru
          _
        // Predicated region
        $region33: #{tpu_custom_call.1} parent=27 // pred_check
          %p244 = pneg %p62
        $region34: #{tpu_custom_call.1} parent=27 // pred_check_branch
          %246 = sbr.rel (%p244) target = $region36
        $region35: #{tpu_custom_call.1} parent=27 // pred_region
          %p247 = scmp.lt.s32.totalorder %s16, 1
          %s248 = scalar_select %p247, %s16, 1
          %s249 = smul.addr %s248, 2
          %s250 = scalar_lea.vmem %s1, %s249
        $region36: #{tpu_custom_call.1} parent=27 // pred_fallthru
          _
        // Predicated region
        $region37: #{tpu_custom_call.1} parent=27 // pred_check
          %p251 = pneg %p88
        $region38: #{tpu_custom_call.1} parent=27 // pred_check_branch
          %253 = sbr.rel (%p251) target = $region40
        $region39: #{tpu_custom_call.1} parent=27 // pred_region
          %p254 = scmp.lt.s32.totalorder %s16, 1
          %s255 = scalar_select %p254, %s16, 1
          %s256 = smul.addr %s255, 2
          %s257 = scalar_lea.vmem %s2, %s256
        $region40: #{tpu_custom_call.1} parent=27 // pred_fallthru
          _
        // Predicated region
        $region41: #{tpu_custom_call.1} parent=27 // pred_check
          %p258 = pneg %p114
        $region42: #{tpu_custom_call.1} parent=27 // pred_check_branch
          %260 = sbr.rel (%p258) target = $region44
        $region43: #{tpu_custom_call.1} parent=27 // pred_region
          %p261 = scmp.lt.s32.totalorder %s16, 1
          %s262 = scalar_select %p261, %s16, 1
          %s263 = smul.addr %s262, 2
          %s264 = scalar_lea.vmem %s3, %s263
        $region44: #{tpu_custom_call.1} parent=27 // pred_fallthru
          _
      $region28: #{tpu_custom_call.1} parent=5 // pred_fallthru
        _
      %p265 = scmp.le.s32.totalorder 1, %s16
      %p266 = scmp.lt.s32.totalorder %s16, 3
      %p267 = pnand %p265, %p266
      %p268 = pneg %p267
      // Predicated region
      $region45: #{tpu_custom_call.1} parent=5 // pred_check
        _
      $region46: #{tpu_custom_call.1} parent=5 // pred_check_branch
        %270 = sbr.rel (%p267) target = $region48
      $region47: #{tpu_custom_call.1} parent=5 // pred_region
        %s271 = ssub.s32 %s16, 1
        %p272 = scmp.lt.s32.totalorder %s21, 1
        %s273 = scalar_select %p272, %s21, 1
        %s274 = smul.addr %s273, 2
        %s275 = scalar_lea.vmem %s0, %s274
        %p276 = pneg %p42
        %p277 = pneg %p39
        %p278 = scmp.lt.s32.totalorder %s21, 1
        %s279 = scalar_select %p278, %s21, 1
        %s280 = smul.addr %s279, 2
        %s281 = scalar_lea.vmem %s1, %s280
        %p282 = pneg %p68
        %p283 = pneg %p65
        %p284 = scmp.lt.s32.totalorder %s21, 1
        %s285 = scalar_select %p284, %s21, 1
        %s286 = smul.addr %s285, 2
        %s287 = scalar_lea.vmem %s2, %s286
        %p288 = pneg %p94
        %p289 = pneg %p91
        %p290 = scmp.lt.s32.totalorder %s21, 1
        %s291 = scalar_select %p290, %s21, 1
        %s292 = smul.addr %s291, 2
        %s293 = scalar_lea.vmem %s3, %s292
        %p294 = pneg %p120
        %p295 = pneg %p117
        %p296 = pneg %p141
        %p297 = pneg %p138
        %p298 = pneg %p162
        %p299 = pneg %p159
        %p300 = pneg %p183
        %p301 = pneg %p180
        %p302 = pneg %p209
        %p303 = pneg %p206
        %s304 = sand.u32 %s196, 1
        %s305 = scalar_lea.sflag [#allocation3], %s304
        %s306 = sand.u32 %s196, 1
        %s307 = smul.addr %s306, 4
        %s308 = scalar_lea.vmem [#allocation2], %s307
        %p309 = scmp.lt.s32.totalorder %s21, 1
        %s310 = scalar_select %p309, %s21, 1
        %s311 = smul.addr %s310, 2
        %s312 = scalar_lea.vmem %s0, %s311
        %p313 = scmp.lt.s32.totalorder %s21, 1
        %s314 = scalar_select %p313, %s21, 1
        %s315 = smul.addr %s314, 2
        %s316 = scalar_lea.vmem %s1, %s315
        %p317 = scmp.lt.s32.totalorder %s21, 1
        %s318 = scalar_select %p317, %s21, 1
        %s319 = smul.addr %s318, 2
        %s320 = scalar_lea.vmem %s2, %s319
        %p321 = scmp.lt.s32.totalorder %s21, 1
        %s322 = scalar_select %p321, %s21, 1
        %s323 = smul.addr %s322, 2
        %s324 = scalar_lea.vmem %s3, %s323
        %v326 = vld [vmem:[%s312] sm:$0x3]
        %v327 = vld [vmem:[%s4] sm:$0xf]
        %v328 = vld [vmem:[%s316] sm:$0x3]
        %s329 = scalar_lea.vmem %s4, 4
        %v330 = vld [vmem:[%s329] sm:$0xf]
        %vm331 = vcmask 31744
        %v333 = vsel %vm331, %v330, 0
        %vm335 = vcmask 1041408
        %v337 = vsel %vm335, %v328, 0
        %339 = vmatprep.subr.bf16.mxu0 0
        %340 = vmatpush1.bf16.msra.mxu0 0
        %341 = vmatprep.subr.bf16.mxu0 0
        %342 = vmatpush1.bf16.msra.mxu0 0
        %343 = vmatprep.subr.bf16.mxu0 0
        %344 = vmatpush1.bf16.msra.mxu0 0
        %345 = vmatprep.subr.bf16.mxu0 0
        %346 = vmatpush1.bf16.msra.mxu0 0
        %347 = vmatprep.subr.bf16.mxu0 0
        %348 = vmatpush1.bf16.msra.mxu0 0
        %349 = vmatprep.subr.bf16.mxu0 0
        %350 = vmatpush1.bf16.msra.mxu0 0
        %351 = vmatprep.subr.bf16.mxu0 0
        %352 = vmatpush1.bf16.msra.mxu0 0
        %353 = vmatprep.subr.bf16.mxu0 0
        %354 = vmatpush1.bf16.msra.mxu0 %v337
        %355 = vmatprep.subr.bf16.mxu0 0
        %356 = vmatpush2.bf16.msra.mxu0 0
        %357 = vmatprep.subr.bf16.mxu0 0
        %358 = vmatpush2.bf16.msra.mxu0 0
        %359 = vmatprep.subr.bf16.mxu0 0
        %360 = vmatpush2.bf16.msra.mxu0 0
        %361 = vmatprep.subr.bf16.mxu0 0
        %362 = vmatpush2.bf16.msra.mxu0 0
        %363 = vmatprep.subr.bf16.mxu0 0
        %364 = vmatpush2.bf16.msra.mxu0 0
        %365 = vmatprep.subr.bf16.mxu0 0
        %366 = vmatpush2.bf16.msra.mxu0 0
        %367 = vmatprep.subr.bf16.mxu0 0
        %368 = vmatpush2.bf16.msra.mxu0 0
        %369 = vmatprep.subr.bf16.mxu0 0
        %370 = vmatpush2.bf16.msra.mxu0 0
        %371 = vmatprep.mubr.bf16.mxu0 0
        %372 = vmatmul.mubr.bf16.gmra.mxu0 %v333
        %v373 = vpop.f32.mrf.mxu0
        %v374 = vadd.f32 0.0, %v373
        %v375 = vpop.f32.mrf.mxu0
        %v376 = vpop.f32.mrf.mxu0
        %v377 = vpop.f32.mrf.mxu0
        %378 = vdwg.mxu0
        %v380 = vsel %vm331, %v327, 0
        %v383 = vsel %vm335, %v326, 0
        %385 = vmatprep.subr.bf16.mxu0 0
        %386 = vmatpush1.bf16.msra.mxu0 0
        %387 = vmatprep.subr.bf16.mxu0 0
        %388 = vmatpush1.bf16.msra.mxu0 0
        %389 = vmatprep.subr.bf16.mxu0 0
        %390 = vmatpush1.bf16.msra.mxu0 0
        %391 = vmatprep.subr.bf16.mxu0 0
        %392 = vmatpush1.bf16.msra.mxu0 0
        %393 = vmatprep.subr.bf16.mxu0 0
        %394 = vmatpush1.bf16.msra.mxu0 0
        %395 = vmatprep.subr.bf16.mxu0 0
        %396 = vmatpush1.bf16.msra.mxu0 0
        %397 = vmatprep.subr.bf16.mxu0 0
        %398 = vmatpush1.bf16.msra.mxu0 0
        %399 = vmatprep.subr.bf16.mxu0 0
        %400 = vmatpush1.bf16.msra.mxu0 %v383
        %401 = vmatprep.subr.bf16.mxu0 0
        %402 = vmatpush2.bf16.msra.mxu0 0
        %403 = vmatprep.subr.bf16.mxu0 0
        %404 = vmatpush2.bf16.msra.mxu0 0
        %405 = vmatprep.subr.bf16.mxu0 0
        %406 = vmatpush2.bf16.msra.mxu0 0
        %407 = vmatprep.subr.bf16.mxu0 0
        %408 = vmatpush2.bf16.msra.mxu0 0
        %409 = vmatprep.subr.bf16.mxu0 0
        %410 = vmatpush2.bf16.msra.mxu0 0
        %411 = vmatprep.subr.bf16.mxu0 0
        %412 = vmatpush2.bf16.msra.mxu0 0
        %413 = vmatprep.subr.bf16.mxu0 0
        %414 = vmatpush2.bf16.msra.mxu0 0
        %415 = vmatprep.subr.bf16.mxu0 0
        %416 = vmatpush2.bf16.msra.mxu0 0
        %417 = vmatprep.mubr.bf16.mxu0 0
        %418 = vmatmul.mubr.bf16.gmra.mxu0 %v380
        %v419 = vpop.f32.mrf.mxu0
        %v420 = vadd.f32 %v374, %v419
        %v421 = vpop.f32.mrf.mxu0
        %v422 = vpop.f32.mrf.mxu0
        %v423 = vpop.f32.mrf.mxu0
        %424 = vdwg.mxu0
        %s425 = scalar_lea.vmem %s4, 8
        %v426 = vld [vmem:[%s425] sm:$0xf]
        %v429 = vunpack.c.l.s4 1983009808
        %v430 = vunpack.c.0.s8 %v429
        %v431 = vlaneseq
        %v432 = vshrl.u32 %v431, 7
        %v433 = vsub.s32 %v430, %v432
        %v434 = vrot.slane %v326, %v433
        %435 = vrot.lane.b32.xlu0 %v434, 127
        %v436 = vpop.permute.xlu0 %435
        %v438 = vsel %vm331, %v426, 0
        %v441 = vsel %vm335, %v436, 0
        %443 = vmatprep.subr.bf16.mxu0 0
        %444 = vmatpush1.bf16.msra.mxu0 0
        %445 = vmatprep.subr.bf16.mxu0 0
        %446 = vmatpush1.bf16.msra.mxu0 0
        %447 = vmatprep.subr.bf16.mxu0 0
        %448 = vmatpush1.bf16.msra.mxu0 0
        %449 = vmatprep.subr.bf16.mxu0 0
        %450 = vmatpush1.bf16.msra.mxu0 0
        %451 = vmatprep.subr.bf16.mxu0 0
        %452 = vmatpush1.bf16.msra.mxu0 0
        %453 = vmatprep.subr.bf16.mxu0 0
        %454 = vmatpush1.bf16.msra.mxu0 0
        %455 = vmatprep.subr.bf16.mxu0 0
        %456 = vmatpush1.bf16.msra.mxu0 0
        %457 = vmatprep.subr.bf16.mxu0 0
        %458 = vmatpush1.bf16.msra.mxu0 %v441
        %459 = vmatprep.subr.bf16.mxu0 0
        %460 = vmatpush2.bf16.msra.mxu0 0
        %461 = vmatprep.subr.bf16.mxu0 0
        %462 = vmatpush2.bf16.msra.mxu0 0
        %463 = vmatprep.subr.bf16.mxu0 0
        %464 = vmatpush2.bf16.msra.mxu0 0
        %465 = vmatprep.subr.bf16.mxu0 0
        %466 = vmatpush2.bf16.msra.mxu0 0
        %467 = vmatprep.subr.bf16.mxu0 0
        %468 = vmatpush2.bf16.msra.mxu0 0
        %469 = vmatprep.subr.bf16.mxu0 0
        %470 = vmatpush2.bf16.msra.mxu0 0
        %471 = vmatprep.subr.bf16.mxu0 0
        %472 = vmatpush2.bf16.msra.mxu0 0
        %473 = vmatprep.subr.bf16.mxu0 0
        %474 = vmatpush2.bf16.msra.mxu0 0
        %475 = vmatprep.mubr.bf16.mxu0 0
        %476 = vmatmul.mubr.bf16.gmra.mxu0 %v438
        %v477 = vpop.f32.mrf.mxu0
        %v478 = vadd.f32 0.0, %v477
        %v479 = vpop.f32.mrf.mxu0
        %v480 = vpop.f32.mrf.mxu0
        %v481 = vpop.f32.mrf.mxu0
        %482 = vdwg.mxu0
        %v483 = vadd.f32 %v420, %v478
        %v484 = vld [vmem:[%s320] sm:$0x3]
        %s485 = scalar_lea.vmem %s4, 12
        %v486 = vld [vmem:[%s485] sm:$0xf]
        %v488 = vsel %vm331, %v486, 0
        %v491 = vsel %vm335, %v484, 0
        %493 = vmatprep.subr.bf16.mxu0 0
        %494 = vmatpush1.bf16.msra.mxu0 0
        %495 = vmatprep.subr.bf16.mxu0 0
        %496 = vmatpush1.bf16.msra.mxu0 0
        %497 = vmatprep.subr.bf16.mxu0 0
        %498 = vmatpush1.bf16.msra.mxu0 0
        %499 = vmatprep.subr.bf16.mxu0 0
        %500 = vmatpush1.bf16.msra.mxu0 0
        %501 = vmatprep.subr.bf16.mxu0 0
        %502 = vmatpush1.bf16.msra.mxu0 0
        %503 = vmatprep.subr.bf16.mxu0 0
        %504 = vmatpush1.bf16.msra.mxu0 0
        %505 = vmatprep.subr.bf16.mxu0 0
        %506 = vmatpush1.bf16.msra.mxu0 0
        %507 = vmatprep.subr.bf16.mxu0 0
        %508 = vmatpush1.bf16.msra.mxu0 %v491
        %509 = vmatprep.subr.bf16.mxu0 0
        %510 = vmatpush2.bf16.msra.mxu0 0
        %511 = vmatprep.subr.bf16.mxu0 0
        %512 = vmatpush2.bf16.msra.mxu0 0
        %513 = vmatprep.subr.bf16.mxu0 0
        %514 = vmatpush2.bf16.msra.mxu0 0
        %515 = vmatprep.subr.bf16.mxu0 0
        %516 = vmatpush2.bf16.msra.mxu0 0
        %517 = vmatprep.subr.bf16.mxu0 0
        %518 = vmatpush2.bf16.msra.mxu0 0
        %519 = vmatprep.subr.bf16.mxu0 0
        %520 = vmatpush2.bf16.msra.mxu0 0
        %521 = vmatprep.subr.bf16.mxu0 0
        %522 = vmatpush2.bf16.msra.mxu0 0
        %523 = vmatprep.subr.bf16.mxu0 0
        %524 = vmatpush2.bf16.msra.mxu0 0
        %525 = vmatprep.mubr.bf16.mxu0 0
        %526 = vmatmul.mubr.bf16.gmra.mxu0 %v488
        %v527 = vpop.f32.mrf.mxu0
        %v528 = vadd.f32 0.0, %v527
        %v529 = vpop.f32.mrf.mxu0
        %v530 = vpop.f32.mrf.mxu0
        %v531 = vpop.f32.mrf.mxu0
        %532 = vdwg.mxu0
        %v533 = vadd.f32 %v483, %v528
        %v534 = vld [vmem:[%s324] sm:$0x3]
        %s535 = scalar_lea.vmem %s4, 16
        %v536 = vld [vmem:[%s535] sm:$0xf]
        %v538 = vsel %vm331, %v536, 0
        %v541 = vsel %vm335, %v534, 0
        %543 = vmatprep.subr.bf16.mxu0 0
        %544 = vmatpush1.bf16.msra.mxu0 0
        %545 = vmatprep.subr.bf16.mxu0 0
        %546 = vmatpush1.bf16.msra.mxu0 0
        %547 = vmatprep.subr.bf16.mxu0 0
        %548 = vmatpush1.bf16.msra.mxu0 0
        %549 = vmatprep.subr.bf16.mxu0 0
        %550 = vmatpush1.bf16.msra.mxu0 0
        %551 = vmatprep.subr.bf16.mxu0 0
        %552 = vmatpush1.bf16.msra.mxu0 0
        %553 = vmatprep.subr.bf16.mxu0 0
        %554 = vmatpush1.bf16.msra.mxu0 0
        %555 = vmatprep.subr.bf16.mxu0 0
        %556 = vmatpush1.bf16.msra.mxu0 0
        %557 = vmatprep.subr.bf16.mxu0 0
        %558 = vmatpush1.bf16.msra.mxu0 %v541
        %559 = vmatprep.subr.bf16.mxu0 0
        %560 = vmatpush2.bf16.msra.mxu0 0
        %561 = vmatprep.subr.bf16.mxu0 0
        %562 = vmatpush2.bf16.msra.mxu0 0
        %563 = vmatprep.subr.bf16.mxu0 0
        %564 = vmatpush2.bf16.msra.mxu0 0
        %565 = vmatprep.subr.bf16.mxu0 0
        %566 = vmatpush2.bf16.msra.mxu0 0
        %567 = vmatprep.subr.bf16.mxu0 0
        %568 = vmatpush2.bf16.msra.mxu0 0
        %569 = vmatprep.subr.bf16.mxu0 0
        %570 = vmatpush2.bf16.msra.mxu0 0
        %571 = vmatprep.subr.bf16.mxu0 0
        %572 = vmatpush2.bf16.msra.mxu0 0
        %573 = vmatprep.subr.bf16.mxu0 0
        %574 = vmatpush2.bf16.msra.mxu0 0
        %575 = vmatprep.mubr.bf16.mxu0 0
        %576 = vmatmul.mubr.bf16.gmra.mxu0 %v538
        %v577 = vpop.f32.mrf.mxu0
        %v578 = vadd.f32 0.0, %v577
        %v579 = vpop.f32.mrf.mxu0
        %v580 = vpop.f32.mrf.mxu0
        %v581 = vpop.f32.mrf.mxu0
        %582 = vdwg.mxu0
        %v583 = vadd.f32 %v533, %v578
        %s584 = scalar_lea.vmem %s4, 20
        %v585 = vld [vmem:[%s584] sm:$0xf]
        %v588 = vunpack.c.l.s4 1983009808
        %v589 = vunpack.c.0.s8 %v588
        %v590 = vlaneseq
        %v591 = vshrl.u32 %v590, 7
        %v592 = vsub.s32 %v589, %v591
        %v593 = vrot.slane %v484, %v592
        %594 = vrot.lane.b32.xlu0 %v593, 127
        %v595 = vpop.permute.xlu0 %594
        %v597 = vsel %vm331, %v585, 0
        %v600 = vsel %vm335, %v595, 0
        %602 = vmatprep.subr.bf16.mxu0 0
        %603 = vmatpush1.bf16.msra.mxu0 0
        %604 = vmatprep.subr.bf16.mxu0 0
        %605 = vmatpush1.bf16.msra.mxu0 0
        %606 = vmatprep.subr.bf16.mxu0 0
        %607 = vmatpush1.bf16.msra.mxu0 0
        %608 = vmatprep.subr.bf16.mxu0 0
        %609 = vmatpush1.bf16.msra.mxu0 0
        %610 = vmatprep.subr.bf16.mxu0 0
        %611 = vmatpush1.bf16.msra.mxu0 0
        %612 = vmatprep.subr.bf16.mxu0 0
        %613 = vmatpush1.bf16.msra.mxu0 0
        %614 = vmatprep.subr.bf16.mxu0 0
        %615 = vmatpush1.bf16.msra.mxu0 0
        %616 = vmatprep.subr.bf16.mxu0 0
        %617 = vmatpush1.bf16.msra.mxu0 %v600
        %618 = vmatprep.subr.bf16.mxu0 0
        %619 = vmatpush2.bf16.msra.mxu0 0
        %620 = vmatprep.subr.bf16.mxu0 0
        %621 = vmatpush2.bf16.msra.mxu0 0
        %622 = vmatprep.subr.bf16.mxu0 0
        %623 = vmatpush2.bf16.msra.mxu0 0
        %624 = vmatprep.subr.bf16.mxu0 0
        %625 = vmatpush2.bf16.msra.mxu0 0
        %626 = vmatprep.subr.bf16.mxu0 0
        %627 = vmatpush2.bf16.msra.mxu0 0
        %628 = vmatprep.subr.bf16.mxu0 0
        %629 = vmatpush2.bf16.msra.mxu0 0
        %630 = vmatprep.subr.bf16.mxu0 0
        %631 = vmatpush2.bf16.msra.mxu0 0
        %632 = vmatprep.subr.bf16.mxu0 0
        %633 = vmatpush2.bf16.msra.mxu0 0
        %634 = vmatprep.mubr.bf16.mxu0 0
        %635 = vmatmul.mubr.bf16.gmra.mxu0 %v597
        %v636 = vpop.f32.mrf.mxu0
        %v637 = vadd.f32 0.0, %v636
        %v638 = vpop.f32.mrf.mxu0
        %v639 = vpop.f32.mrf.mxu0
        %v640 = vpop.f32.mrf.mxu0
        %641 = vdwg.mxu0
        %v642 = vadd.f32 %v583, %v637
        %v643 = vld [vmem:[%s312] sm:$0x3]
        %s644 = scalar_lea.vmem %s4, 24
        %v645 = vld [vmem:[%s644] sm:$0xf]
        %v648 = vunpack.c.l.s4 1983009808
        %v649 = vunpack.c.0.s8 %v648
        %v650 = vlaneseq
        %v651 = vshrl.u32 %v650, 7
        %v652 = vsub.s32 %v649, %v651
        %v653 = vrot.slane %v643, %v652
        %654 = vrot.lane.b32.xlu0 %v653, 118
        %v655 = vpop.permute.xlu0 %654
        %v657 = vsel %vm331, %v645, 0
        %v660 = vsel %vm335, %v655, 0
        %662 = vmatprep.subr.bf16.mxu0 0
        %663 = vmatpush1.bf16.msra.mxu0 0
        %664 = vmatprep.subr.bf16.mxu0 0
        %665 = vmatpush1.bf16.msra.mxu0 0
        %666 = vmatprep.subr.bf16.mxu0 0
        %667 = vmatpush1.bf16.msra.mxu0 0
        %668 = vmatprep.subr.bf16.mxu0 0
        %669 = vmatpush1.bf16.msra.mxu0 0
        %670 = vmatprep.subr.bf16.mxu0 0
        %671 = vmatpush1.bf16.msra.mxu0 0
        %672 = vmatprep.subr.bf16.mxu0 0
        %673 = vmatpush1.bf16.msra.mxu0 0
        %674 = vmatprep.subr.bf16.mxu0 0
        %675 = vmatpush1.bf16.msra.mxu0 0
        %676 = vmatprep.subr.bf16.mxu0 0
        %677 = vmatpush1.bf16.msra.mxu0 %v660
        %678 = vmatprep.subr.bf16.mxu0 0
        %679 = vmatpush2.bf16.msra.mxu0 0
        %680 = vmatprep.subr.bf16.mxu0 0
        %681 = vmatpush2.bf16.msra.mxu0 0
        %682 = vmatprep.subr.bf16.mxu0 0
        %683 = vmatpush2.bf16.msra.mxu0 0
        %684 = vmatprep.subr.bf16.mxu0 0
        %685 = vmatpush2.bf16.msra.mxu0 0
        %686 = vmatprep.subr.bf16.mxu0 0
        %687 = vmatpush2.bf16.msra.mxu0 0
        %688 = vmatprep.subr.bf16.mxu0 0
        %689 = vmatpush2.bf16.msra.mxu0 0
        %690 = vmatprep.subr.bf16.mxu0 0
        %691 = vmatpush2.bf16.msra.mxu0 0
        %692 = vmatprep.subr.bf16.mxu0 0
        %693 = vmatpush2.bf16.msra.mxu0 0
        %694 = vmatprep.mubr.bf16.mxu0 0
        %695 = vmatmul.mubr.bf16.gmra.mxu0 %v657
        %v696 = vpop.f32.mrf.mxu0
        %v697 = vadd.f32 0.0, %v696
        %v698 = vpop.f32.mrf.mxu0
        %v699 = vpop.f32.mrf.mxu0
        %v700 = vpop.f32.mrf.mxu0
        %701 = vdwg.mxu0
        %v702 = vadd.f32 %v642, %v697
        %v703 = vld [vmem:[%s316] sm:$0x3]
        %s704 = scalar_lea.vmem %s4, 28
        %v705 = vld [vmem:[%s704] sm:$0xf]
        %v708 = vunpack.c.l.s4 1983009808
        %v709 = vunpack.c.0.s8 %v708
        %v710 = vlaneseq
        %v711 = vshrl.u32 %v710, 7
        %v712 = vsub.s32 %v709, %v711
        %v713 = vrot.slane %v703, %v712
        %714 = vrot.lane.b32.xlu0 %v713, 118
        %v715 = vpop.permute.xlu0 %714
        %v717 = vsel %vm331, %v705, 0
        %v720 = vsel %vm335, %v715, 0
        %722 = vmatprep.subr.bf16.mxu0 0
        %723 = vmatpush1.bf16.msra.mxu0 0
        %724 = vmatprep.subr.bf16.mxu0 0
        %725 = vmatpush1.bf16.msra.mxu0 0
        %726 = vmatprep.subr.bf16.mxu0 0
        %727 = vmatpush1.bf16.msra.mxu0 0
        %728 = vmatprep.subr.bf16.mxu0 0
        %729 = vmatpush1.bf16.msra.mxu0 0
        %730 = vmatprep.subr.bf16.mxu0 0
        %731 = vmatpush1.bf16.msra.mxu0 0
        %732 = vmatprep.subr.bf16.mxu0 0
        %733 = vmatpush1.bf16.msra.mxu0 0
        %734 = vmatprep.subr.bf16.mxu0 0
        %735 = vmatpush1.bf16.msra.mxu0 0
        %736 = vmatprep.subr.bf16.mxu0 0
        %737 = vmatpush1.bf16.msra.mxu0 %v720
        %738 = vmatprep.subr.bf16.mxu0 0
        %739 = vmatpush2.bf16.msra.mxu0 0
        %740 = vmatprep.subr.bf16.mxu0 0
        %741 = vmatpush2.bf16.msra.mxu0 0
        %742 = vmatprep.subr.bf16.mxu0 0
        %743 = vmatpush2.bf16.msra.mxu0 0
        %744 = vmatprep.subr.bf16.mxu0 0
        %745 = vmatpush2.bf16.msra.mxu0 0
        %746 = vmatprep.subr.bf16.mxu0 0
        %747 = vmatpush2.bf16.msra.mxu0 0
        %748 = vmatprep.subr.bf16.mxu0 0
        %749 = vmatpush2.bf16.msra.mxu0 0
        %750 = vmatprep.subr.bf16.mxu0 0
        %751 = vmatpush2.bf16.msra.mxu0 0
        %752 = vmatprep.subr.bf16.mxu0 0
        %753 = vmatpush2.bf16.msra.mxu0 0
        %754 = vmatprep.mubr.bf16.mxu0 0
        %755 = vmatmul.mubr.bf16.gmra.mxu0 %v717
        %v756 = vpop.f32.mrf.mxu0
        %v757 = vadd.f32 0.0, %v756
        %v758 = vpop.f32.mrf.mxu0
        %v759 = vpop.f32.mrf.mxu0
        %v760 = vpop.f32.mrf.mxu0
        %761 = vdwg.mxu0
        %v762 = vadd.f32 %v702, %v757
        %v763 = vld [vmem:[%s312] sm:$0x3]
        %s764 = scalar_lea.vmem %s4, 32
        %v765 = vld [vmem:[%s764] sm:$0xf]
        %v768 = vunpack.c.l.s4 1983009808
        %v769 = vunpack.c.0.s8 %v768
        %v770 = vlaneseq
        %v771 = vshrl.u32 %v770, 7
        %v772 = vsub.s32 %v769, %v771
        %v773 = vrot.slane %v763, %v772
        %774 = vrot.lane.b32.xlu0 %v773, 117
        %v775 = vpop.permute.xlu0 %774
        %v777 = vsel %vm331, %v765, 0
        %v780 = vsel %vm335, %v775, 0
        %782 = vmatprep.subr.bf16.mxu0 0
        %783 = vmatpush1.bf16.msra.mxu0 0
        %784 = vmatprep.subr.bf16.mxu0 0
        %785 = vmatpush1.bf16.msra.mxu0 0
        %786 = vmatprep.subr.bf16.mxu0 0
        %787 = vmatpush1.bf16.msra.mxu0 0
        %788 = vmatprep.subr.bf16.mxu0 0
        %789 = vmatpush1.bf16.msra.mxu0 0
        %790 = vmatprep.subr.bf16.mxu0 0
        %791 = vmatpush1.bf16.msra.mxu0 0
        %792 = vmatprep.subr.bf16.mxu0 0
        %793 = vmatpush1.bf16.msra.mxu0 0
        %794 = vmatprep.subr.bf16.mxu0 0
        %795 = vmatpush1.bf16.msra.mxu0 0
        %796 = vmatprep.subr.bf16.mxu0 0
        %797 = vmatpush1.bf16.msra.mxu0 %v780
        %798 = vmatprep.subr.bf16.mxu0 0
        %799 = vmatpush2.bf16.msra.mxu0 0
        %800 = vmatprep.subr.bf16.mxu0 0
        %801 = vmatpush2.bf16.msra.mxu0 0
        %802 = vmatprep.subr.bf16.mxu0 0
        %803 = vmatpush2.bf16.msra.mxu0 0
        %804 = vmatprep.subr.bf16.mxu0 0
        %805 = vmatpush2.bf16.msra.mxu0 0
        %806 = vmatprep.subr.bf16.mxu0 0
        %807 = vmatpush2.bf16.msra.mxu0 0
        %808 = vmatprep.subr.bf16.mxu0 0
        %809 = vmatpush2.bf16.msra.mxu0 0
        %810 = vmatprep.subr.bf16.mxu0 0
        %811 = vmatpush2.bf16.msra.mxu0 0
        %812 = vmatprep.subr.bf16.mxu0 0
        %813 = vmatpush2.bf16.msra.mxu0 0
        %814 = vmatprep.mubr.bf16.mxu0 0
        %815 = vmatmul.mubr.bf16.gmra.mxu0 %v777
        %v816 = vpop.f32.mrf.mxu0
        %v817 = vadd.f32 0.0, %v816
        %v818 = vpop.f32.mrf.mxu0
        %v819 = vpop.f32.mrf.mxu0
        %v820 = vpop.f32.mrf.mxu0
        %821 = vdwg.mxu0
        %v822 = vadd.f32 %v762, %v817
        %v823 = vld [vmem:[%s5] sm:$0xff]
        %825 = vset.pattern.permute.xlu0 0
        %826 = vperm.xlu0 %825, %v823
        %v827 = vpop.permute.xlu0 %826
        %v829 = vadd.f32 %v822, %v827
        %v830 = vmax.f32 %v829, 0.0
        %v831 = vld [vmem:[%s6] sm:$0x1]
        %v833 = vlaneseq
        %v834 = vshrl.u32 %v833, 7
        %v835 = vsub.s32 0, %v834
        %v836 = vrot.slane %v831, %v835
        %v838 = vmul.f32 %v830, %v836
        %vm839 = vcmask 896000
        %840 = vst.msk [vmem:[%s308] sm:$0xf] %vm839, 0
        %v841 = vpack.c.bf16 %v838, %v838
        %v843 = vunpack.c.l.b16 %v841
        %v844 = vpack.c.b16 %v843, %v843
        %845 = vrot.lane.b32.xlu0 %v844, 11
        %v846 = vpop.permute.xlu0 %845
        %vm848 = vcmask 740440
        %849 = vst.msk [vmem:[%s308] sm:$0xf] %vm848, %v846
        %s850 = sand.u32 %s196, 1
        %s851 = scalar_lea.sflag [#allocation3], %s850
        %s852 = sand.u32 %s196, 1
        %s853 = smul.addr %s852, 4
        %s854 = scalar_lea.vmem [#allocation2], %s853
        // Predicated region
        $region49: #{tpu_custom_call.1} parent=47 // pred_check
          %p855 = pneg %p206
        $region50: #{tpu_custom_call.1} parent=47 // pred_check_branch
          %857 = sbr.rel (%p855) target = $region52
        $region51: #{tpu_custom_call.1} parent=47 // pred_region
          %s859 = ssub.s32 64, 64
          %860 = vsyncadd %s851, %s859
          %s861 = smul.addr %s21, 64
          %s862 = scalar_lea.hbm %s7, %s861
          %s864 = sshll.u32 %s854, 4
          %s865 = int_to_ptr.vmem [resolvable:$true] %s864
          %867 = dma.vmem_to_hbm [thread:$0]  %s865, 64, %s862, %s851
        $region52: #{tpu_custom_call.1} parent=47 // pred_fallthru
          _
      $region48: #{tpu_custom_call.1} parent=5 // pred_fallthru
        _
      %p868 = scmp.le.s32.totalorder 2, %s16
      // Predicated region
      $region53: #{tpu_custom_call.1} parent=5 // pred_check
        %p869 = pneg %p868
      $region54: #{tpu_custom_call.1} parent=5 // pred_check_branch
        %871 = sbr.rel (%p869) target = $region56
      $region55: #{tpu_custom_call.1} parent=5 // pred_region
        %s872 = ssub.s32 %s16, 2
        // Predicated region
        $region57: #{tpu_custom_call.1} parent=55 // pred_check
          %p873 = pneg %p212
        $region58: #{tpu_custom_call.1} parent=55 // pred_check_branch
          %875 = sbr.rel (%p873) target = $region60
        $region59: #{tpu_custom_call.1} parent=55 // pred_region
          %s876 = sand.u32 %s197, 1
          %s877 = scalar_lea.sflag [#allocation3], %s876
          %s878 = sand.u32 %s197, 1
          %s879 = smul.addr %s878, 4
          %s880 = scalar_lea.vmem [#allocation2], %s879
          %881 = dma.done %s877, 64
        $region60: #{tpu_custom_call.1} parent=55 // pred_fallthru
          _
      $region56: #{tpu_custom_call.1} parent=5 // pred_fallthru
        _
    $region6: #{tpu_custom_call.1} parent=1 // loop_footer
      %s20 = sadd.s32 1, %s16
    $region7: #{tpu_custom_call.1} parent=1 // loop_footer_branch
      %15 = sbr.rel target = $region3
    $region8: #{tpu_custom_call.1} parent=1 // loop_exit
      _
    %882 = vsyncpa [#allocation3], 1
    %s883 = scalar_lea.sflag [#allocation3], 1
    %884 = vsyncpa %s883, 1

</llo_original>
